<compile_context>
chip_gen: v7x
topology: tpu7x:2x2x1
jax: 0.10.0
libtpu: 0.0.40
codegen_flags: <defaults>
</compile_context>

<pallas_src>
import numpy as np
import jax
import jax.numpy as jnp
from jax import lax
from jax.experimental import pallas as pl
from jax.experimental.pallas import tpu as pltpu


# ----------------------------- tiling helpers --------------------------------


def _device_vmem_bytes():
    try:
        info = pltpu.get_tpu_info()
        v = getattr(info, "vmem_capacity_bytes", None)
        if v:
            return int(v)
    except Exception:
        pass
    return 64 * 1024 * 1024          # conservative default (v7x per-core VMEM)


def _target_block_bytes():
    # ~16 MiB input blocks on 128-MiB-VMEM parts (v5e/v6e), ~8 MiB on v7x.
    return int(min(16 * 1024 * 1024, _device_vmem_bytes() // 8))


def _vmem_limit(bytes_needed):
    dev = _device_vmem_bytes()
    return int(min(dev * 7 // 8, max(32 * 1024 * 1024, int(1.5 * bytes_needed))))


def _pick_row_tile(n_rows, bytes_per_row, target_bytes, min_tiles=1):
    """Largest divisor of n_rows under target_bytes per block, >= min_tiles blocks."""
    # TODO(synk): non-divisor tiling (pl.cdiv + partial last tile) so awkward row
    # counts keep multi-MiB blocks instead of degrading towards TH=1.
    max_th = n_rows if min_tiles <= 1 else max(1, n_rows // min_tiles)
    best = 1
    for d in range(1, max_th + 1):
        if n_rows % d == 0 and d * bytes_per_row <= target_bytes:
            best = d
    return best


# ----------------------------- avg-pool path ---------------------------------


def _avgpool_kernel(x_ref, o_ref):
    # x_ref: (TH, 2, Wo, 2*C)  [out row, row parity, out col, col parity * C]
    # o_ref: (TH, Wo, C)
    C = o_ref.shape[-1]
    x = x_ref[...].astype(jnp.float32)
    s = x[:, 0] + x[:, 1]                                   # sum over row parity
    o_ref[...] = (0.25 * (s[..., :C] + s[..., C:])).astype(o_ref.dtype)


def avg_pool_downsample_nhwc(x_nhwc):
    """2x2 / stride-2 average pool on an NHWC tensor (f32 math, exact)."""
    B, H, W, C = x_nhwc.shape
    assert H % 2 == 0 and W % 2 == 0, "Downsample expects even H and W"
    Ho, Wo = H // 2, W // 2

    # Fold both stride-2 parities off the (sublane, lane) tile: free view.
    x_f = x_nhwc.reshape(B, Ho, 2, Wo, 2 * C)

    itemsize = x_nhwc.dtype.itemsize
    pair_bytes = 2 * Wo * 2 * C * itemsize
    min_tiles = max(1, -(-4 // B))            # >= 4 parallel steps (2 TCs on v7x)
    TH = _pick_row_tile(Ho, pair_bytes, _target_block_bytes(), min_tiles)
    grid = (B, Ho // TH)

    need = 2 * (TH * pair_bytes + TH * Wo * C * itemsize)
    # NOTE: for C < 128 the output stores are lane-masked; realistic DDPM
    # channel counts (>=128) store lane-dense.

    return pl.pallas_call(
        _avgpool_kernel,
        out_shape=jax.ShapeDtypeStruct((B, Ho, Wo, C), x_nhwc.dtype),
        grid=grid,
        in_specs=[
            pl.BlockSpec((None, TH, 2, Wo, 2 * C), lambda b, t: (b, t, 0, 0, 0)),
        ],
        out_specs=pl.BlockSpec((None, TH, Wo, C), lambda b, t: (b, t, 0, 0)),
        compiler_params=pltpu.CompilerParams(
            dimension_semantics=("parallel", "parallel"),
            vmem_limit_bytes=_vmem_limit(need)),
        cost_estimate=pl.CostEstimate(
            flops=int(4 * B * Ho * Wo * C),
            transcendentals=0,
            bytes_accessed=int(B * H * W * C * itemsize
                               + B * Ho * Wo * C * itemsize)),
    )(x_f)


# ------------------------------- conv path -----------------------------------


def _conv_kernel(xb_ref, xh_ref, w01_ref, w2_ref, b_ref, o_ref):
    # xb_ref : (TH, 2, Wo, 2*Cin)  body row pairs (compute dtype)
    # xh_ref : (1, 1, Wo, 2*Cin)   halo: parity-0 row of the next tile's first pair
    # w01_ref: (3, 2*Cin, Cout)    kw in {0,1} taps, stacked per kh
    # w2_ref : (3, Cin,   Cout)    kw == 2 tap, per kh
    # b_ref  : (1, Cout)           f32 bias
    # o_ref  : (TH, Wo, Cout)
    TH, Wo, Cout = o_ref.shape
    C2 = xb_ref.shape[-1]
    Cin = C2 // 2
    M = TH * Wo
    cdt = w01_ref.dtype
    f32 = jnp.float32

    xb = xb_ref[...].astype(cdt)                      # (TH, 2, Wo, 2*Cin)
    xh = xh_ref[0].astype(cdt)                        # (1, Wo, 2*Cin)
    # On the last row tile the halo row is the bottom zero-pad row of
    # F.pad(x, (0,1,0,1)) -> zero its contribution there.
    keep = (pl.program_id(1) + 1 < pl.num_programs(1)).astype(f32)

    # kw == 2 operand: even-column lanes shifted one output column left
    # (sublane roll, XLU slot -> co-issues with MXU/VPU) with the last output
    # column zeroed (it reads the right zero-pad column of F.pad).
    col = lax.broadcasted_iota(jnp.int32, (Wo, 1), 0)
    colmask = (col < (Wo - 1)).astype(cdt)            # (Wo, 1)

    def kw2(rows):                                    # (..., Wo, 2*Cin) -> (..., Wo, Cin)
        ev = rows[..., :Cin]
        return pltpu.roll(ev, shift=Wo - 1, axis=ev.ndim - 2) * colmask

    rows0 = xb[:, 0]                                  # input row 2*oh     (kh = 0)
    rows1 = xb[:, 1]                                  # input row 2*oh + 1 (kh = 1)

    # Value accumulator: partials stay under compiler control (vregs / MRB on
    # v7x) -- no VMEM scratch round trips between taps.
    acc = jnp.broadcast_to(b_ref[...].astype(f32), (M, Cout))
    acc = acc + jnp.dot(rows0.reshape(M, C2), w01_ref[0], preferred_element_type=f32)
    acc = acc + jnp.dot(kw2(rows0).reshape(M, Cin), w2_ref[0], preferred_element_type=f32)
    acc = acc + jnp.dot(rows1.reshape(M, C2), w01_ref[1], preferred_element_type=f32)
    acc = acc + jnp.dot(kw2(rows1).reshape(M, Cin), w2_ref[1], preferred_element_type=f32)

    # kh == 2 (input row 2*oh + 2): the source is the NEXT row pair's parity-0
    # row.  Body rows and the tile's last row (fed by the halo block) are
    # handled as two disjoint output-row stores -- no per-step concatenate.
    if TH > 1:
        rows2 = xb[1:, 0]                             # (TH-1, Wo, 2*Cin)
        Mb = (TH - 1) * Wo
        body = jnp.dot(rows2.reshape(Mb, C2), w01_ref[2], preferred_element_type=f32)
        body = body + jnp.dot(kw2(rows2).reshape(Mb, Cin), w2_ref[2],
                              preferred_element_type=f32)
        o_ref[:TH - 1] = (acc[:Mb] + body).reshape(TH - 1, Wo, Cout).astype(o_ref.dtype)

    halo = jnp.dot(xh.reshape(Wo, C2), w01_ref[2], preferred_element_type=f32)
    halo = halo + jnp.dot(kw2(xh).reshape(Wo, Cin), w2_ref[2],
                          preferred_element_type=f32)
    o_ref[TH - 1:] = (acc[(TH - 1) * Wo:] + halo * keep
                      ).reshape(1, Wo, Cout).astype(o_ref.dtype)


def conv_downsample_nhwc(x_nhwc, w_hwio, bias, *, out_dtype=None,
                         compute_dtype=jnp.bfloat16):
    """F.pad(x, (0,1,0,1)) + 3x3 stride-2 conv (DDPM Downsample) on NHWC input."""
    B, H, W, C = x_nhwc.shape
    assert H % 2 == 0 and W % 2 == 0, "Downsample expects even H and W"
    assert w_hwio.shape == (3, 3, C, C)
    Ho, Wo = H // 2, W // 2
    if out_dtype is None:
        out_dtype = x_nhwc.dtype

    # Compute-dtype activations for the MXU (f32 accumulation in-kernel); the
    # cast fuses into the NCHW->NHWC transpose and the parity fold is a free
    # view.  No spatial pad: the +1 right/bottom halo lives in the kernel.
    # NOTE: Wo % 8 == 0 and C % 128 == 0 is the relayout-free fast path.
    x_c = x_nhwc.astype(compute_dtype)
    x_f = x_c.reshape(B, Ho, 2, Wo, 2 * C)

    # Weights regrouped once so kw in {0,1} share one K = 2*C contraction.
    w_c = w_hwio.astype(compute_dtype)
    w01 = w_c[:, 0:2].reshape(3, 2 * C, C)           # [kh, kw*C + ci, co]
    w2 = w_c[:, 2]                                   # [kh, ci, co]
    b2d = bias.astype(jnp.float32).reshape(1, C)

    itemsize = jnp.dtype(compute_dtype).itemsize
    pair_bytes = 2 * Wo * 2 * C * itemsize
    min_tiles = max(1, -(-4 // B))                   # >= 4 parallel steps (2 TCs on v7x)
    TH = _pick_row_tile(Ho, pair_bytes, _target_block_bytes(), min_tiles)
    nT = Ho // TH
    grid = (B, nT)

    out_isize = jnp.dtype(out_dtype).itemsize
    w_bytes = (w01.size + w2.size) * itemsize + b2d.size * 4
    need = (2 * (TH * pair_bytes + Wo * 2 * C * itemsize + w_bytes)
            + 2 * TH * Wo * C * out_isize
            + 3 * TH * Wo * C * 4)                   # f32 value accumulator + slack

    cost = pl.CostEstimate(
        flops=int(2 * B * Ho * Wo * 9 * C * C),
        transcendentals=0,
        bytes_accessed=int(x_f.size * itemsize + (w01.size + w2.size) * itemsize
                           + B * Ho * Wo * C * out_isize))

    return pl.pallas_call(
        _conv_kernel,
        out_shape=jax.ShapeDtypeStruct((B, Ho, Wo, C), out_dtype),
        grid=grid,
        in_specs=[
            # Body: output rows [t*TH, (t+1)*TH) <-> the same range of row pairs.
            pl.BlockSpec((None, TH, 2, Wo, 2 * C),
                         lambda b, t: (b, t, 0, 0, 0)),
            # Halo: parity-0 row of the NEXT tile's first row pair only (block
            # size 1 along the pair dim => element index).  On the last tile it
            # wraps to pair 0 and the kernel zeroes its contribution.
            pl.BlockSpec((None, 1, 1, Wo, 2 * C),
                         lambda b, t, TH=TH, nT=nT: (b, ((t + 1) % nT) * TH, 0, 0, 0)),
            # Weights / bias: constant block index -> stay VMEM-resident.
            pl.BlockSpec((3, 2 * C, C), lambda b, t: (0, 0, 0)),
            pl.BlockSpec((3, C, C), lambda b, t: (0, 0, 0)),
            pl.BlockSpec((1, C), lambda b, t: (0, 0)),
        ],
        out_specs=pl.BlockSpec((None, TH, Wo, C), lambda b, t: (b, t, 0, 0)),
        compiler_params=pltpu.CompilerParams(
            dimension_semantics=("parallel", "parallel"),
            vmem_limit_bytes=_vmem_limit(need)),
        cost_estimate=cost,
    )(x_f, x_f, w01, w2, b2d)


# --------------------------------- module -------------------------------------


class Downsample:
    """JAX/Pallas port of the PyTorch Downsample module (NCHW interface)."""

    def __init__(self, channels, with_conv=False, key=None):
        self.with_conv = with_conv
        if with_conv:
            # default_init(1.0): variance_scaling(1.0, 'fan_avg', 'uniform');
            # weight stored as (kh, kw, Cin, Cout); bias zero-initialised.
            shape = (3, 3, channels, channels)
            fan_in = fan_out = channels * 9
            variance = 1.0 / ((fan_in + fan_out) / 2.0)
            limit = float(np.sqrt(3.0 * variance))
            self.w = jax.random.uniform(key, shape, jnp.float32,
                                        minval=-limit, maxval=limit)
            self.b = jnp.zeros((channels,), jnp.float32)

    def __call__(self, x_nchw):
        B, C, H, W = x_nchw.shape
        # NOTE: the two transposes are HBM passes forced by the NCHW module
        # contract; an NHWC model should call the *_nhwc entry points directly.
        x = jnp.transpose(x_nchw, (0, 2, 3, 1))              # NCHW -> NHWC
        if self.with_conv:
            y = conv_downsample_nhwc(x, self.w, self.b, out_dtype=x_nchw.dtype)
        else:
            y = avg_pool_downsample_nhwc(x)
        y = jnp.transpose(y, (0, 3, 1, 2))                   # NHWC -> NCHW
        assert y.shape == (B, C, H // 2, W // 2)
        return y


# ------------------------------- references -----------------------------------


def _ref_avg_pool(x_nchw):
    B, C, H, W = x_nchw.shape
    return x_nchw.reshape(B, C, H // 2, 2, W // 2, 2).mean(axis=(3, 5))


def _ref_conv(x_nchw, w_hwio, bias, compute_dtype=jnp.float32):
    xc = x_nchw.astype(compute_dtype)
    wc = w_hwio.astype(compute_dtype)
    x_pad = jnp.pad(xc, ((0, 0), (0, 0), (0, 1), (0, 1)))
    w_oihw = jnp.transpose(wc, (3, 2, 0, 1))
    y = lax.conv_general_dilated(
        x_pad, w_oihw, window_strides=(2, 2), padding="VALID",
        dimension_numbers=("NCHW", "OIHW", "NCHW"),
        preferred_element_type=jnp.float32)
    y = y + bias.reshape(1, -1, 1, 1).astype(jnp.float32)
    return y.astype(x_nchw.dtype)


# ---------------------------------- main ---------------------------------------

if __name__ == "__main__":
    key = jax.random.PRNGKey(0)
    kx, kw = jax.random.split(key)

    B, C, H, W = 2, 4, 16, 16
    x = jax.random.normal(kx, (B, C, H, W), dtype=jnp.float32)

    # --- with_conv=False : 2x2 stride-2 average pool (exact f32) ---------------
    ds_pool = Downsample(C, with_conv=False)
    y_pool = jax.block_until_ready(jax.jit(lambda v: ds_pool(v))(x))
    y_pool_ref = _ref_avg_pool(x)
    assert y_pool.shape == (B, C, H // 2, W // 2)
    np.testing.assert_allclose(np.asarray(y_pool), np.asarray(y_pool_ref),
                               rtol=1e-5, atol=1e-5)

    # --- with_conv=True : pad (0,1,0,1) + 3x3 stride-2 conv --------------------
    ds_conv = Downsample(C, with_conv=True, key=kw)
    y_conv = jax.block_until_ready(jax.jit(lambda v: ds_conv(v))(x))
    assert y_conv.shape == (B, C, H // 2, W // 2)

    # Apples-to-apples reference: same bf16 operands, f32 accumulation.
    y_ref_bf16 = _ref_conv(x, ds_conv.w, ds_conv.b, compute_dtype=jnp.bfloat16)
    np.testing.assert_allclose(np.asarray(y_conv), np.asarray(y_ref_bf16),
                               rtol=1e-3, atol=1e-3)
    # Sanity check against the full-f32 reference (bf16 rounding tolerance).
    y_ref_f32 = _ref_conv(x, ds_conv.w, ds_conv.b, compute_dtype=jnp.float32)
    np.testing.assert_allclose(np.asarray(y_conv), np.asarray(y_ref_f32),
                               rtol=1e-1, atol=1e-1)

    print("KERNEL_OK")
</pallas_src>

<mosaic_0001>
module attributes {stable_mosaic.version = 11 : i64} {
  func.func @_avgpool_kernel(%arg0: i32, %arg1: i32, %arg2: memref<1x4x2x8x8xf32, #tpu.memory_space<vmem>>, %arg3: memref<1x4x8x4xf32, #tpu.memory_space<vmem>>) attributes {dimension_semantics = [#tpu.dimension_semantics<parallel>, #tpu.dimension_semantics<parallel>], iteration_bounds = array<i64: 2, 2>, scalar_prefetch = 0 : i64, scratch_operands = 0 : i64, tpu.core_type = #tpu.core_type<tc>, window_params = [{transform_indices = @transform_0, window_bounds = array<i64: 1, 4, 2, 8, 8>}, {transform_indices = @transform_1, window_bounds = array<i64: 1, 4, 8, 4>}]} {
    %c0 = arith.constant 0 : index
    %c0_0 = arith.constant 0 : index
    %c0_1 = arith.constant 0 : index
    %c0_2 = arith.constant 0 : index
    %c0_3 = arith.constant 0 : index
    %0 = vector.load %arg2[%c0, %c0_0, %c0_1, %c0_2, %c0_3] : memref<1x4x2x8x8xf32, #tpu.memory_space<vmem>>, vector<1x4x2x8x8xf32>
    %1 = vector.shape_cast %0 : vector<1x4x2x8x8xf32> to vector<4x2x8x8xf32>
    %2 = vector.extract_strided_slice %1 {offsets = [0, 0, 0, 0], sizes = [4, 1, 8, 8], strides = [1, 1, 1, 1]} : vector<4x2x8x8xf32> to vector<4x1x8x8xf32>
    %3 = vector.shape_cast %2 : vector<4x1x8x8xf32> to vector<4x8x8xf32>
    %4 = vector.extract_strided_slice %1 {offsets = [0, 1, 0, 0], sizes = [4, 1, 8, 8], strides = [1, 1, 1, 1]} : vector<4x2x8x8xf32> to vector<4x1x8x8xf32>
    %5 = vector.shape_cast %4 : vector<4x1x8x8xf32> to vector<4x8x8xf32>
    %6 = arith.addf %3, %5 : vector<4x8x8xf32>
    %7 = vector.extract_strided_slice %6 {offsets = [0, 0, 0], sizes = [4, 8, 4], strides = [1, 1, 1]} : vector<4x8x8xf32> to vector<4x8x4xf32>
    %8 = vector.extract_strided_slice %6 {offsets = [0, 0, 4], sizes = [4, 8, 4], strides = [1, 1, 1]} : vector<4x8x8xf32> to vector<4x8x4xf32>
    %9 = arith.addf %7, %8 : vector<4x8x4xf32>
    %cst = arith.constant 2.500000e-01 : f32
    %10 = vector.broadcast %cst : f32 to vector<4x8x4xf32>
    %11 = arith.mulf %10, %9 : vector<4x8x4xf32>
    %c0_4 = arith.constant 0 : index
    %c0_5 = arith.constant 0 : index
    %c0_6 = arith.constant 0 : index
    %c0_7 = arith.constant 0 : index
    %12 = vector.load %arg3[%c0_4, %c0_5, %c0_6, %c0_7] : memref<1x4x8x4xf32, #tpu.memory_space<vmem>>, vector<1x4x8x4xf32>
    %13 = vector.shape_cast %12 : vector<1x4x8x4xf32> to vector<4x8x4xf32>
    %14 = vector.shape_cast %11 : vector<4x8x4xf32> to vector<1x4x8x4xf32>
    tpu.vector_store %arg3[%c0_4, %c0_5, %c0_6, %c0_7], %14 {strides = array<i32>} : memref<1x4x8x4xf32, #tpu.memory_space<vmem>>, vector<1x4x8x4xf32>,
    return
  }
  func.func @transform_0(%arg0: i32, %arg1: i32) -> (i32, i32, i32, i32, i32) {
    %c0_i32 = arith.constant 0 : i32
    %c0_i32_0 = arith.constant 0 : i32
    %c0_i32_1 = arith.constant 0 : i32
    %c0_i32_2 = arith.constant 0 : i32
    return %arg0, %arg1, %c0_i32, %c0_i32_0, %c0_i32_1 : i32, i32, i32, i32, i32
  }
  func.func @transform_1(%arg0: i32, %arg1: i32) -> (i32, i32, i32, i32) {
    %c0_i32 = arith.constant 0 : i32
    %c0_i32_0 = arith.constant 0 : i32
    %c0_i32_1 = arith.constant 0 : i32
    return %arg0, %arg1, %c0_i32, %c0_i32_0 : i32, i32, i32, i32
  }
}

</mosaic_0001>

<llo_original>
// kernel: _lambda_.1
$region0: #{_lambda_.1}
  #allocation0 [shape = 'u32[]', space=smem, size = 0x4, offset = 0x4, fixed_abs, tag = 'smem constant byte address 0x4 - core index']
  #allocation1 [shape = 'u32[144,128]{1,0:T(1,128)}', space=vmem, size = 0x12000, scoped, tag = 'internal scratch']
  %s0 = inlined_call_operand.vmem [shape: f32[2,8,2,8,8], index: 0, kind: input, shape index: {}]
  %s1 = inlined_call_operand.vmem [shape: f32[2,8,8,4], index: 1, kind: output, shape index: {}]
  %s2 = sld [smem:[#allocation0]]
  $region37: #{_lambda_.1} parent=0
    _
  %s4 = ssub.s32 1, %s2
  %s5 = scalar_select 0, %s4, %s2
  loop: start=0, step=1, limit=6
  $region2: #{_lambda_.1} parent=0 // loop_pre_header
    _
  $region3: #{_lambda_.1} parent=0 // loop_header
    %s7 = sphi 0, %s11
    %p8 = scmp.ge.s32.totalorder %s7, 6
    %s14 = sphi 0, %s26
    %s15 = sphi 0, %s22
    %s16 = sphi 0, %s14
    %s17 = sphi 0, %s15
    %s18 = sphi 0, %s16
    %s19 = sphi 0, %s17
    %s31 = sphi 0, %s33
    %s34 = sphi 0, %s31
    %s35 = sphi 0, %s34
    %s51 = sphi 0, %s35
    %s59 = sphi 0, %s61
    %s62 = sphi 0, %s59
    %s63 = sphi 0, %s62
    %s79 = sphi 0, %s63
  $region4: #{_lambda_.1} parent=0 // loop_header_branch
    %10 = sbr.rel (%p8) target = $region8
  $region5: #{_lambda_.1} parent=0 // loop_body
    %s12 = ssub.s32 %s7, 1
    %s13 = ssub.s32 %s7, 2
    %s20 = sadd.s32 1, %s15
    %p21 = scmp.ge.s32.totalorder %s20, 2
    %s22 = scalar_select %p21, 0, %s20
    %s23 = sadd.s32 1, %s14
    %s24 = scalar_select %p21, %s23, %s14
    %p25 = scmp.ge.s32.totalorder %s24, 2
    %s26 = scalar_select %p25, 0, %s24
    %s27 = ssub.s32 %s14, %s26
    %s28 = ssub.s32 %s15, %s22
    %s29 = sor.u32 %s27, %s28
    %p30 = scmp.eq.s32.totalorder %s29, 0
    %s32 = sadd.s32 %s31, 1
    %s33 = scalar_select %p30, %s31, %s32
    %p36 = pneg %p30
    %p37 = scmp.eq.s32.totalorder %s7, 3
    %p38 = por %p36, %p37
    %p39 = scmp.ne.s32.totalorder %s31, %s34
    %p40 = scmp.eq.s32.totalorder %s7, 0
    %p41 = por %p39, %p40
    %p42 = scmp.ne.s32.totalorder %s31, %s34
    %p43 = scmp.eq.s32.totalorder %s12, 3
    %p44 = por %p42, %p43
    %p45 = scmp.ne.s32.totalorder %s34, %s35
    %p46 = scmp.eq.s32.totalorder %s12, 0
    %p47 = por %p45, %p46
    %p48 = scmp.ne.s32.totalorder %s34, %s35
    %p49 = scmp.eq.s32.totalorder %s13, 3
    %p50 = por %p48, %p49
    %p52 = scmp.ne.s32.totalorder %s35, %s51
    %p53 = scmp.eq.s32.totalorder %s13, 0
    %p54 = por %p52, %p53
    %s55 = ssub.s32 %s14, %s26
    %s56 = ssub.s32 %s15, %s22
    %s57 = sor.u32 %s55, %s56
    %p58 = scmp.eq.s32.totalorder %s57, 0
    %s60 = sadd.s32 %s59, 1
    %s61 = scalar_select %p58, %s59, %s60
    %p64 = pneg %p58
    %p65 = scmp.eq.s32.totalorder %s7, 3
    %p66 = por %p64, %p65
    %p67 = scmp.ne.s32.totalorder %s59, %s62
    %p68 = scmp.eq.s32.totalorder %s7, 0
    %p69 = por %p67, %p68
    %p70 = scmp.ne.s32.totalorder %s59, %s62
    %p71 = scmp.eq.s32.totalorder %s12, 3
    %p72 = por %p70, %p71
    %p73 = scmp.ne.s32.totalorder %s62, %s63
    %p74 = scmp.eq.s32.totalorder %s12, 0
    %p75 = por %p73, %p74
    %p76 = scmp.ne.s32.totalorder %s62, %s63
    %p77 = scmp.eq.s32.totalorder %s13, 3
    %p78 = por %p76, %p77
    %p80 = scmp.ne.s32.totalorder %s63, %s79
    %p81 = scmp.eq.s32.totalorder %s13, 0
    %p82 = por %p80, %p81
    %p83 = scmp.le.s32.totalorder 1, %s7
    %p84 = scmp.lt.s32.totalorder %s7, 5
    %p85 = pnand %p83, %p84
    %p86 = pneg %p85
    // Predicated region
    $region9: #{_lambda_.1} parent=5 // pred_check
      _
    $region10: #{_lambda_.1} parent=5 // pred_check_branch
      %88 = sbr.rel (%p85) target = $region12
    $region11: #{_lambda_.1} parent=5 // pred_region
      %s89 = ssub.s32 %s7, 1
    $region12: #{_lambda_.1} parent=5 // pred_fallthru
      _
    %p90 = scmp.lt.s32.totalorder %s7, 4
    // Predicated region
    $region13: #{_lambda_.1} parent=5 // pred_check
      %p91 = pneg %p90
    $region14: #{_lambda_.1} parent=5 // pred_check_branch
      %93 = sbr.rel (%p91) target = $region16
    $region15: #{_lambda_.1} parent=5 // pred_region
      // Predicated region
      $region17: #{_lambda_.1} parent=15 // pred_check
        %p94 = pneg %p41
      $region18: #{_lambda_.1} parent=15 // pred_check_branch
        %96 = sbr.rel (%p94) target = $region20
      $region19: #{_lambda_.1} parent=15 // pred_region
        %s97 = smul.u32 4, %s15
        %p98 = scmp.lt.s32.totalorder %s14, 1
        %s99 = scalar_select %p98, %s14, 1
        %p100 = scmp.lt.s32.totalorder %s97, 7
        %s101 = scalar_select %p100, %s97, 7
        %s102 = smul.addr %s101, 2
        %s103 = smul.addr %s99, 16
        %s104 = sadd.s32 %s102, %s103
        %s105 = smul.addr %s104, 8
        %s106 = scalar_lea.vmem %s0, %s105
        %s107 = smul.u32 4, %s15
      $region20: #{_lambda_.1} parent=15 // pred_fallthru
        _
    $region16: #{_lambda_.1} parent=5 // pred_fallthru
      _
    %p108 = scmp.le.s32.totalorder 1, %s7
    %p109 = scmp.lt.s32.totalorder %s7, 5
    %p110 = pnand %p108, %p109
    %p111 = pneg %p110
    // Predicated region
    $region21: #{_lambda_.1} parent=5 // pred_check
      _
    $region22: #{_lambda_.1} parent=5 // pred_check_branch
      %113 = sbr.rel (%p110) target = $region24
    $region23: #{_lambda_.1} parent=5 // pred_region
      %s114 = ssub.s32 %s7, 1
      %s115 = smul.u32 4, %s17
      %p116 = scmp.lt.s32.totalorder %s16, 1
      %s117 = scalar_select %p116, %s16, 1
      %p118 = scmp.lt.s32.totalorder %s115, 7
      %s119 = scalar_select %p118, %s115, 7
      %s120 = smul.addr %s119, 2
      %s121 = smul.addr %s117, 16
      %s122 = sadd.s32 %s120, %s121
      %s123 = smul.addr %s122, 8
      %s124 = scalar_lea.vmem %s0, %s123
      %p125 = pneg %p47
      %p126 = pneg %p44
      %p127 = pneg %p75
      %p128 = pneg %p72
      %s129 = smul.u32 4, %s17
      %p130 = scmp.lt.s32.totalorder %s16, 1
      %s131 = scalar_select %p130, %s16, 1
      %p132 = scmp.lt.s32.totalorder %s129, 7
      %s133 = scalar_select %p132, %s129, 7
      %s134 = smul.addr %s131, 8
      %s135 = sadd.s32 %s133, %s134
      %s136 = smul.addr %s135, 8
      %s137 = scalar_lea.vmem %s1, %s136
      %s138 = smul.u32 4, %s17
      %p139 = scmp.lt.s32.totalorder %s16, 1
      %s140 = scalar_select %p139, %s16, 1
      %p141 = scmp.lt.s32.totalorder %s138, 7
      %s142 = scalar_select %p141, %s138, 7
      %s143 = smul.addr %s142, 2
      %s144 = smul.addr %s140, 16
      %s145 = sadd.s32 %s143, %s144
      %s146 = smul.addr %s145, 8
      %s147 = scalar_lea.vmem %s0, %s146
      %s148 = smul.u32 4, %s17
      %s149 = smul.u32 4, %s17
      %p150 = scmp.lt.s32.totalorder %s16, 1
      %s151 = scalar_select %p150, %s16, 1
      %p152 = scmp.lt.s32.totalorder %s149, 7
      %s153 = scalar_select %p152, %s149, 7
      %s154 = smul.addr %s151, 8
      %s155 = sadd.s32 %s153, %s154
      %s156 = smul.addr %s155, 8
      %s157 = scalar_lea.vmem %s1, %s156
      %s158 = smul.u32 4, %s17
      %v159 = vld [vmem:[%s147] sm:$0xff]
      %v160 = vld [vmem:[%s147 + $0x8] sm:$0xff]
      %v161 = vld [vmem:[%s147 + $0x10] sm:$0xff]
      %v162 = vld [vmem:[%s147 + $0x18] sm:$0xff]
      %v163 = vld [vmem:[%s147 + $0x20] sm:$0xff]
      %v164 = vld [vmem:[%s147 + $0x28] sm:$0xff]
      %v165 = vld [vmem:[%s147 + $0x30] sm:$0xff]
      %v166 = vld [vmem:[%s147 + $0x38] sm:$0xff]
      %v167 = vadd.f32 %v159, %v160
      %v168 = vadd.f32 %v161, %v162
      %v169 = vadd.f32 %v163, %v164
      %v170 = vadd.f32 %v165, %v166
      %175 = vrot.lane.b32.xlu0 %v167, 124
      %v176 = vpop.permute.xlu0 %175
      %177 = vrot.lane.b32.xlu0 %v168, 124
      %v178 = vpop.permute.xlu0 %177
      %179 = vrot.lane.b32.xlu0 %v169, 124
      %v180 = vpop.permute.xlu0 %179
      %181 = vrot.lane.b32.xlu0 %v170, 124
      %v182 = vpop.permute.xlu0 %181
      %v187 = vadd.f32 %v167, %v176
      %v188 = vadd.f32 %v168, %v178
      %v189 = vadd.f32 %v169, %v180
      %v190 = vadd.f32 %v170, %v182
      %v191 = vmul.f32 %v187, 0.25
      %v192 = vmul.f32 %v188, 0.25
      %v193 = vmul.f32 %v189, 0.25
      %v194 = vmul.f32 %v190, 0.25
      %vm195 = vcmask 31744
      %196 = vst.msk [vmem:[%s157] sm:$0xff] %vm195, %v191
      %197 = vst.msk [vmem:[%s157 + $0x8] sm:$0xff] %vm195, %v192
      %198 = vst.msk [vmem:[%s157 + $0x10] sm:$0xff] %vm195, %v193
      %199 = vst.msk [vmem:[%s157 + $0x18] sm:$0xff] %vm195, %v194
      %s200 = smul.u32 4, %s17
      %p201 = scmp.lt.s32.totalorder %s16, 1
      %s202 = scalar_select %p201, %s16, 1
      %p203 = scmp.lt.s32.totalorder %s200, 7
      %s204 = scalar_select %p203, %s200, 7
      %s205 = smul.addr %s202, 8
      %s206 = sadd.s32 %s204, %s205
      %s207 = smul.addr %s206, 8
      %s208 = scalar_lea.vmem %s1, %s207
      // Predicated region
      $region25: #{_lambda_.1} parent=23 // pred_check
        %p209 = pneg %p72
      $region26: #{_lambda_.1} parent=23 // pred_check_branch
        %211 = sbr.rel (%p209) target = $region28
      $region27: #{_lambda_.1} parent=23 // pred_region
        %s212 = smul.u32 4, %s17
      $region28: #{_lambda_.1} parent=23 // pred_fallthru
        _
    $region24: #{_lambda_.1} parent=5 // pred_fallthru
      _
    %p213 = scmp.le.s32.totalorder 2, %s7
    // Predicated region
    $region29: #{_lambda_.1} parent=5 // pred_check
      %p214 = pneg %p213
    $region30: #{_lambda_.1} parent=5 // pred_check_branch
      %216 = sbr.rel (%p214) target = $region32
    $region31: #{_lambda_.1} parent=5 // pred_region
      %s217 = ssub.s32 %s7, 2
      // Predicated region
      $region33: #{_lambda_.1} parent=31 // pred_check
        %p218 = pneg %p78
      $region34: #{_lambda_.1} parent=31 // pred_check_branch
        %220 = sbr.rel (%p218) target = $region36
      $region35: #{_lambda_.1} parent=31 // pred_region
        %s221 = smul.u32 4, %s19
        %p222 = scmp.lt.s32.totalorder %s18, 1
        %s223 = scalar_select %p222, %s18, 1
        %p224 = scmp.lt.s32.totalorder %s221, 7
        %s225 = scalar_select %p224, %s221, 7
        %s226 = smul.addr %s223, 8
        %s227 = sadd.s32 %s225, %s226
        %s228 = smul.addr %s227, 8
        %s229 = scalar_lea.vmem %s1, %s228
      $region36: #{_lambda_.1} parent=31 // pred_fallthru
        _
    $region32: #{_lambda_.1} parent=5 // pred_fallthru
      _
  $region6: #{_lambda_.1} parent=0 // loop_footer
    %s11 = sadd.s32 1, %s7
  $region7: #{_lambda_.1} parent=0 // loop_footer_branch
    %6 = sbr.rel target = $region3
  $region8: #{_lambda_.1} parent=0 // loop_exit
    _

</llo_original>
